<compile_context>
chip_gen: v7x
topology: tpu7x:2x2x1
jax: 0.10.0
libtpu: 0.0.40
codegen_flags: <defaults>
</compile_context>

<pallas_src>
import functools

import jax
import jax.numpy as jnp
from jax.experimental import pallas as pl
from jax.experimental.pallas import tpu as pltpu

_OUT_LANES = 128  # lane-dense padded output width (logical out dim is 2)


def _round_up(n, m):
    return ((n + m - 1) // m) * m


def _mlp_head_kernel(x_ref, w1_ref, b1_ref, w2_ref, b2_ref, w3_ref, b3_ref,
                     o_ref):
    # x_ref: (TM, d_model) row tile in the compute dtype (bf16 by default);
    # weights are full (untiled) blocks in the compute dtype, biases in f32.
    x = x_ref[...]

    # Linear1 + ReLU: MXU matmul with f32 accumulation; elementwise in f32.
    h1 = jnp.dot(x, w1_ref[...], preferred_element_type=jnp.float32)
    h1 = jnp.maximum(h1 + b1_ref[...], 0.0)

    # Linear2 + ReLU.
    h2 = jnp.dot(h1.astype(w2_ref.dtype), w2_ref[...],
                 preferred_element_type=jnp.float32)
    h2 = jnp.maximum(h2 + b2_ref[...], 0.0)

    # Linear3 (logits).  W3/b3 are zero-padded to 128 output lanes so this
    # store is lane-dense; columns >= 2 are exactly 0 (zero weights + 0 bias).
    out = jnp.dot(h2.astype(w3_ref.dtype), w3_ref[...],
                  preferred_element_type=jnp.float32)
    out = out + b3_ref[...]

    o_ref[...] = out.astype(o_ref.dtype)


@functools.partial(jax.jit, static_argnames=("tile_rows", "compute_dtype"))
def mlp_head(x, params, *, tile_rows=512, compute_dtype=jnp.bfloat16):
    """x: (batch, seq, d_model) -> (batch, seq, 2) logits (no softmax)."""
    w1, b1, w2, b2, w3, b3 = params
    B, S, D = x.shape
    rows = B * S
    out_dim = w3.shape[1]  # 2

    # ---- choose the effective row tile ---------------------------------
    tm = min(tile_rows, _round_up(rows, 8))
    if rows >= 32:
        # Keep at least ~4 grid steps so both v7x TensorCores stay fed and
        # the input pipeline has something to overlap.
        tm = min(tm, max(8, _round_up(-(-rows // 4), 8)))
    tm = max(8, _round_up(tm, 8))
    rows_p = _round_up(rows, tm)
    grid = (rows_p // tm,)

    # ---- prepare operands -----------------------------------------------
    x2d = x.reshape(rows, D).astype(compute_dtype)
    if rows_p != rows:
        x2d = jnp.pad(x2d, ((0, rows_p - rows), (0, 0)))

    w1c = w1.astype(compute_dtype)
    w2c = w2.astype(compute_dtype)
    b1c = b1.reshape(1, -1).astype(jnp.float32)
    b2c = b2.reshape(1, -1).astype(jnp.float32)

    # Zero-pad the last layer to a full 128-lane output (lane-dense store).
    w3p = jnp.zeros((w3.shape[0], _OUT_LANES), compute_dtype)
    w3p = w3p.at[:, :out_dim].set(w3.astype(compute_dtype))
    b3p = jnp.zeros((1, _OUT_LANES), jnp.float32)
    b3p = b3p.at[:, :out_dim].set(b3.astype(jnp.float32))

    full = lambda i: (0, 0)  # weights / biases: same full block every step

    # VMEM budget: double-buffered x and out tiles, weights, f32 temps.
    itm = jnp.dtype(compute_dtype).itemsize
    vmem_est = (2 * tm * D * itm                               # x tiles
                + 2 * tm * _OUT_LANES * 4                      # out tiles
                + 2 * (D * 128 + 128 * 32 + 32 * _OUT_LANES) * itm  # weights
                + 2 * (128 + 32 + _OUT_LANES) * 4              # biases
                + 2 * tm * 128 * 4)                            # f32 activations
    compiler_kwargs = dict(dimension_semantics=("parallel",))
    if vmem_est > 24 * 1024 * 1024:
        # Headroom, but stay within v7x's 64 MiB physical VMEM.
        compiler_kwargs["vmem_limit_bytes"] = min(2 * vmem_est,
                                                  60 * 1024 * 1024)

    # TODO(synk): optionally sweep pipeline_mode=pl.Buffered(3) on the x spec
    # if a profile shows the input DMA is still exposed at large tiles.
    out2d = pl.pallas_call(
        _mlp_head_kernel,
        out_shape=jax.ShapeDtypeStruct((rows_p, _OUT_LANES), jnp.float32),
        grid_spec=pltpu.PrefetchScalarGridSpec(
            num_scalar_prefetch=0,
            grid=grid,
            in_specs=[
                pl.BlockSpec((tm, D), lambda i: (i, 0)),  # x row tile
                pl.BlockSpec(w1c.shape, full),            # W1 (D,128)
                pl.BlockSpec(b1c.shape, full),            # b1 (1,128)
                pl.BlockSpec(w2c.shape, full),            # W2 (128,32)
                pl.BlockSpec(b2c.shape, full),            # b2 (1,32)
                pl.BlockSpec(w3p.shape, full),            # W3 (32,128) padded
                pl.BlockSpec(b3p.shape, full),            # b3 (1,128) padded
            ],
            out_specs=pl.BlockSpec((tm, _OUT_LANES), lambda i: (i, 0)),
        ),
        compiler_params=pltpu.CompilerParams(**compiler_kwargs),
    )(x2d, w1c, b1c, w2c, b2c, w3p, b3p)

    out = out2d[:rows, :out_dim].reshape(B, S, out_dim)
    return out.astype(x.dtype)


def init_params(key, d_model):
    """Deterministic parameter init (PyTorch-Linear-like uniform fan-in)."""
    ks = jax.random.split(key, 6)

    def linear_init(kw, kb, fan_in, fan_out):
        bound = 1.0 / jnp.sqrt(fan_in)
        w = jax.random.uniform(kw, (fan_in, fan_out), jnp.float32,
                               -bound, bound)
        b = jax.random.uniform(kb, (fan_out,), jnp.float32, -bound, bound)
        return w, b

    w1, b1 = linear_init(ks[0], ks[1], d_model, 128)
    w2, b2 = linear_init(ks[2], ks[3], 128, 32)
    w3, b3 = linear_init(ks[4], ks[5], 32, 2)
    return (w1, b1, w2, b2, w3, b3)


def _reference(x, params):
    w1, b1, w2, b2, w3, b3 = params
    h = jnp.maximum(x @ w1 + b1, 0.0)
    h = jnp.maximum(h @ w2 + b2, 0.0)
    return h @ w3 + b3


if __name__ == "__main__":
    key = jax.random.PRNGKey(0)
    k_x, k_p, k_x2 = jax.random.split(key, 3)

    batch, seq, d_model = 2, 8, 32
    x = jax.random.normal(k_x, (batch, seq, d_model), jnp.float32)
    params = init_params(k_p, d_model)
    ref = _reference(x, params)

    # f32-compute path: exact parity with the f32 reference.
    out_f32 = jax.block_until_ready(
        mlp_head(x, params, compute_dtype=jnp.float32))
    assert out_f32.shape == (batch, seq, 2)
    assert jnp.allclose(out_f32, ref, atol=1e-5, rtol=1e-5)

    # Default path: bf16 DMA/MXU inputs with f32 accumulation.
    out_bf16 = jax.block_until_ready(mlp_head(x, params))
    assert out_bf16.shape == (batch, seq, 2)
    assert jnp.allclose(out_bf16, ref, atol=5e-2, rtol=5e-2)

    # Ragged row count: exercises the cdiv grid + row-padding path
    # (batch*seq not a multiple of the tile).
    b2_, s2_ = 3, 37
    x2 = jax.random.normal(k_x2, (b2_, s2_, d_model), jnp.float32)
    out2 = jax.block_until_ready(mlp_head(x2, params, tile_rows=64))
    ref2 = _reference(x2, params)
    assert out2.shape == (b2_, s2_, 2)
    assert jnp.allclose(out2, ref2, atol=5e-2, rtol=5e-2)

    print("KERNEL_OK")
</pallas_src>

<mosaic_0001>
module attributes {stable_mosaic.version = 11 : i64} {
  func.func @_mlp_head_kernel(%arg0: i32, %arg1: memref<16x32xf32, #tpu.memory_space<vmem>>, %arg2: memref<32x128xf32, #tpu.memory_space<vmem>>, %arg3: memref<1x128xf32, #tpu.memory_space<vmem>>, %arg4: memref<128x32xf32, #tpu.memory_space<vmem>>, %arg5: memref<1x32xf32, #tpu.memory_space<vmem>>, %arg6: memref<32x128xf32, #tpu.memory_space<vmem>>, %arg7: memref<1x128xf32, #tpu.memory_space<vmem>>, %arg8: memref<16x128xf32, #tpu.memory_space<vmem>>) attributes {dimension_semantics = [#tpu.dimension_semantics<parallel>], iteration_bounds = array<i64: 1>, scalar_prefetch = 0 : i64, scratch_operands = 0 : i64, tpu.core_type = #tpu.core_type<tc>, window_params = [{transform_indices = @transform_0, window_bounds = array<i64: 16, 32>}, {pipeline_mode = #tpu.pipeline_mode<synchronous>, transform_indices = @transform_1, window_bounds = array<i64: 32, 128>}, {pipeline_mode = #tpu.pipeline_mode<synchronous>, transform_indices = @transform_2, window_bounds = array<i64: 1, 128>}, {pipeline_mode = #tpu.pipeline_mode<synchronous>, transform_indices = @transform_3, window_bounds = array<i64: 128, 32>}, {pipeline_mode = #tpu.pipeline_mode<synchronous>, transform_indices = @transform_4, window_bounds = array<i64: 1, 32>}, {pipeline_mode = #tpu.pipeline_mode<synchronous>, transform_indices = @transform_5, window_bounds = array<i64: 32, 128>}, {pipeline_mode = #tpu.pipeline_mode<synchronous>, transform_indices = @transform_6, window_bounds = array<i64: 1, 128>}, {transform_indices = @transform_7, window_bounds = array<i64: 16, 128>}]} {
    %c0 = arith.constant 0 : index
    %c0_0 = arith.constant 0 : index
    %0 = vector.load %arg1[%c0, %c0_0] : memref<16x32xf32, #tpu.memory_space<vmem>>, vector<16x32xf32>
    %c0_1 = arith.constant 0 : index
    %c0_2 = arith.constant 0 : index
    %1 = vector.load %arg2[%c0_1, %c0_2] : memref<32x128xf32, #tpu.memory_space<vmem>>, vector<32x128xf32>
    %cst = arith.constant dense<0.000000e+00> : vector<16x128xf32>
    %2 = tpu.matmul %0, %1, %cst {dimension_numbers = #tpu.dot_dimension_numbers<[1], [0], [0], [1], [0, 0, 1, 1], [], []>} : vector<16x32xf32>, vector<32x128xf32>, vector<16x128xf32> -> vector<16x128xf32>
    %c0_3 = arith.constant 0 : index
    %c0_4 = arith.constant 0 : index
    %3 = vector.load %arg3[%c0_3, %c0_4] : memref<1x128xf32, #tpu.memory_space<vmem>>, vector<1x128xf32>
    %4 = vector.broadcast %3 : vector<1x128xf32> to vector<16x128xf32>
    %5 = arith.addf %2, %4 : vector<16x128xf32>
    %cst_5 = arith.constant 0.000000e+00 : f32
    %6 = vector.broadcast %cst_5 : f32 to vector<16x128xf32>
    %7 = arith.maximumf %5, %6 : vector<16x128xf32>
    %c0_6 = arith.constant 0 : index
    %c0_7 = arith.constant 0 : index
    %8 = vector.load %arg4[%c0_6, %c0_7] : memref<128x32xf32, #tpu.memory_space<vmem>>, vector<128x32xf32>
    %cst_8 = arith.constant dense<0.000000e+00> : vector<16x32xf32>
    %9 = tpu.matmul %7, %8, %cst_8 {dimension_numbers = #tpu.dot_dimension_numbers<[1], [0], [0], [1], [0, 0, 1, 1], [], []>} : vector<16x128xf32>, vector<128x32xf32>, vector<16x32xf32> -> vector<16x32xf32>
    %c0_9 = arith.constant 0 : index
    %c0_10 = arith.constant 0 : index
    %10 = vector.load %arg5[%c0_9, %c0_10] : memref<1x32xf32, #tpu.memory_space<vmem>>, vector<1x32xf32>
    %11 = vector.broadcast %10 : vector<1x32xf32> to vector<16x32xf32>
    %12 = arith.addf %9, %11 : vector<16x32xf32>
    %cst_11 = arith.constant 0.000000e+00 : f32
    %13 = vector.broadcast %cst_11 : f32 to vector<16x32xf32>
    %14 = arith.maximumf %12, %13 : vector<16x32xf32>
    %c0_12 = arith.constant 0 : index
    %c0_13 = arith.constant 0 : index
    %15 = vector.load %arg6[%c0_12, %c0_13] : memref<32x128xf32, #tpu.memory_space<vmem>>, vector<32x128xf32>
    %cst_14 = arith.constant dense<0.000000e+00> : vector<16x128xf32>
    %16 = tpu.matmul %14, %15, %cst_14 {dimension_numbers = #tpu.dot_dimension_numbers<[1], [0], [0], [1], [0, 0, 1, 1], [], []>} : vector<16x32xf32>, vector<32x128xf32>, vector<16x128xf32> -> vector<16x128xf32>
    %c0_15 = arith.constant 0 : index
    %c0_16 = arith.constant 0 : index
    %17 = vector.load %arg7[%c0_15, %c0_16] : memref<1x128xf32, #tpu.memory_space<vmem>>, vector<1x128xf32>
    %18 = vector.broadcast %17 : vector<1x128xf32> to vector<16x128xf32>
    %19 = arith.addf %16, %18 : vector<16x128xf32>
    %c0_17 = arith.constant 0 : index
    %c0_18 = arith.constant 0 : index
    %20 = vector.load %arg8[%c0_17, %c0_18] : memref<16x128xf32, #tpu.memory_space<vmem>>, vector<16x128xf32>
    tpu.vector_store %arg8[%c0_17, %c0_18], %19 {strides = array<i32>} : memref<16x128xf32, #tpu.memory_space<vmem>>, vector<16x128xf32>,
    return
  }
  func.func @transform_0(%arg0: i32) -> (i32, i32) {
    %c0_i32 = arith.constant 0 : i32
    %c0_i32_0 = arith.constant 0 : i32
    return %arg0, %c0_i32 : i32, i32
  }
  func.func @transform_1(%arg0: i32) -> (i32, i32) {
    %c0_i32 = arith.constant 0 : i32
    %c0_i32_0 = arith.constant 0 : i32
    %c0_i32_1 = arith.constant 0 : i32
    return %c0_i32, %c0_i32_0 : i32, i32
  }
  func.func @transform_2(%arg0: i32) -> (i32, i32) {
    %c0_i32 = arith.constant 0 : i32
    %c0_i32_0 = arith.constant 0 : i32
    %c0_i32_1 = arith.constant 0 : i32
    return %c0_i32, %c0_i32_0 : i32, i32
  }
  func.func @transform_3(%arg0: i32) -> (i32, i32) {
    %c0_i32 = arith.constant 0 : i32
    %c0_i32_0 = arith.constant 0 : i32
    %c0_i32_1 = arith.constant 0 : i32
    return %c0_i32, %c0_i32_0 : i32, i32
  }
  func.func @transform_4(%arg0: i32) -> (i32, i32) {
    %c0_i32 = arith.constant 0 : i32
    %c0_i32_0 = arith.constant 0 : i32
    %c0_i32_1 = arith.constant 0 : i32
    return %c0_i32, %c0_i32_0 : i32, i32
  }
  func.func @transform_5(%arg0: i32) -> (i32, i32) {
    %c0_i32 = arith.constant 0 : i32
    %c0_i32_0 = arith.constant 0 : i32
    %c0_i32_1 = arith.constant 0 : i32
    return %c0_i32, %c0_i32_0 : i32, i32
  }
  func.func @transform_6(%arg0: i32) -> (i32, i32) {
    %c0_i32 = arith.constant 0 : i32
    %c0_i32_0 = arith.constant 0 : i32
    %c0_i32_1 = arith.constant 0 : i32
    return %c0_i32, %c0_i32_0 : i32, i32
  }
  func.func @transform_7(%arg0: i32) -> (i32, i32) {
    %c0_i32 = arith.constant 0 : i32
    %c0_i32_0 = arith.constant 0 : i32
    return %arg0, %c0_i32 : i32, i32
  }
}

</mosaic_0001>

<llo_original>
// kernel: mlp_head.1
$region0: #{mlp_head.1}
  #allocation0 [shape = 'u32[]', space=smem, size = 0x4, offset = 0x4, fixed_abs, tag = 'smem constant byte address 0x4 - core index']
  #allocation1 [shape = 'u32[144,128]{1,0:T(1,128)}', space=vmem, size = 0x12000, scoped, tag = 'internal scratch']
  %s0 = inlined_call_operand.vmem [shape: f32[16,32], index: 0, kind: input, shape index: {}]
  %s1 = inlined_call_operand.vmem [shape: f32[32,128], index: 1, kind: input, shape index: {}]
  %s2 = inlined_call_operand.vmem [shape: f32[1,128], index: 2, kind: input, shape index: {}]
  %s3 = inlined_call_operand.vmem [shape: f32[128,32], index: 3, kind: input, shape index: {}]
  %s4 = inlined_call_operand.vmem [shape: f32[1,32], index: 4, kind: input, shape index: {}]
  %s5 = inlined_call_operand.vmem [shape: f32[32,128], index: 5, kind: input, shape index: {}]
  %s6 = inlined_call_operand.vmem [shape: f32[1,128], index: 6, kind: input, shape index: {}]
  %s7 = inlined_call_operand.vmem [shape: f32[16,128], index: 7, kind: output, shape index: {}]
  %s8 = sld [smem:[#allocation0]]
  $region38: #{mlp_head.1} parent=0
    _
  %s10 = ssub.s32 1, %s8
  %s11 = scalar_select 0, %s10, %s8
  // Predicated region
  $region2: #{mlp_head.1} parent=0 // pred_check
    _
  $region3: #{mlp_head.1} parent=0 // pred_check_branch
    %13 = sbr.rel (0) target = $region5
  $region4: #{mlp_head.1} parent=0 // pred_region
    _
  $region5: #{mlp_head.1} parent=0 // pred_fallthru
    _
  // Predicated region
  $region6: #{mlp_head.1} parent=0 // pred_check
    _
  $region7: #{mlp_head.1} parent=0 // pred_check_branch
    %15 = sbr.rel (0) target = $region9
  $region8: #{mlp_head.1} parent=0 // pred_region
    _
  $region9: #{mlp_head.1} parent=0 // pred_fallthru
    _
  // Predicated region
  $region10: #{mlp_head.1} parent=0 // pred_check
    _
  $region11: #{mlp_head.1} parent=0 // pred_check_branch
    %17 = sbr.rel (0) target = $region13
  $region12: #{mlp_head.1} parent=0 // pred_region
    _
  $region13: #{mlp_head.1} parent=0 // pred_fallthru
    _
  // Predicated region
  $region14: #{mlp_head.1} parent=0 // pred_check
    _
  $region15: #{mlp_head.1} parent=0 // pred_check_branch
    %19 = sbr.rel (0) target = $region17
  $region16: #{mlp_head.1} parent=0 // pred_region
    _
  $region17: #{mlp_head.1} parent=0 // pred_fallthru
    _
  // Predicated region
  $region18: #{mlp_head.1} parent=0 // pred_check
    _
  $region19: #{mlp_head.1} parent=0 // pred_check_branch
    %21 = sbr.rel (0) target = $region21
  $region20: #{mlp_head.1} parent=0 // pred_region
    _
  $region21: #{mlp_head.1} parent=0 // pred_fallthru
    _
  // Predicated region
  $region22: #{mlp_head.1} parent=0 // pred_check
    _
  $region23: #{mlp_head.1} parent=0 // pred_check_branch
    %23 = sbr.rel (0) target = $region25
  $region24: #{mlp_head.1} parent=0 // pred_region
    _
  $region25: #{mlp_head.1} parent=0 // pred_fallthru
    _
  // Predicated region
  $region26: #{mlp_head.1} parent=0 // pred_check
    _
  $region27: #{mlp_head.1} parent=0 // pred_check_branch
    %25 = sbr.rel (0) target = $region29
  $region28: #{mlp_head.1} parent=0 // pred_region
    _
  $region29: #{mlp_head.1} parent=0 // pred_fallthru
    _
  %v26 = vld [vmem:[%s0] sm:$0xff]
  %v27 = vld [vmem:[%s0 + $0x8] sm:$0xff]
  %v28 = vld [vmem:[%s1] sm:$0xff]
  %v29 = vld [vmem:[%s1 + $0x8] sm:$0xff]
  %v30 = vld [vmem:[%s1 + $0x10] sm:$0xff]
  %v31 = vld [vmem:[%s1 + $0x18] sm:$0xff]
  %v32 = vld [vmem:[%s2] sm:$0x1]
  %v34 = vlaneseq
  %v35 = vshrl.u32 %v34, 7
  %v36 = vsub.s32 0, %v35
  %v37 = vrot.slane %v32, %v36
  %vm39 = vcmask 261120
  %v41 = vsel %vm39, %v26, 0
  %v44 = vsel %vm39, %v27, 0
  %46 = vmatprep.subr.mxu0 0.0
  %47 = vmatpush1.msra.mxu0 %v28
  %48 = vmatprep.subr.mxu0 0.0
  %49 = vmatpush1.msra.mxu0 %v29
  %50 = vmatprep.subr.mxu0 0.0
  %51 = vmatpush1.msra.mxu0 %v30
  %52 = vmatprep.subr.mxu0 0.0
  %53 = vmatpush1.msra.mxu0 %v31
  %54 = vmatprep.subr.mxu0 0.0
  %55 = vmatpush1.msra.mxu0 0.0
  %56 = vmatprep.subr.mxu0 0.0
  %57 = vmatpush1.msra.mxu0 0.0
  %58 = vmatprep.subr.mxu0 0.0
  %59 = vmatpush1.msra.mxu0 0.0
  %60 = vmatprep.subr.mxu0 0.0
  %61 = vmatpush1.msra.mxu0 0.0
  %62 = vmatprep.subr.mxu0 0.0
  %63 = vmatpush1.msra.mxu0 0.0
  %64 = vmatprep.subr.mxu0 0.0
  %65 = vmatpush1.msra.mxu0 0.0
  %66 = vmatprep.subr.mxu0 0.0
  %67 = vmatpush1.msra.mxu0 0.0
  %68 = vmatprep.subr.mxu0 0.0
  %69 = vmatpush1.msra.mxu0 0.0
  %70 = vmatprep.subr.mxu0 0.0
  %71 = vmatpush1.msra.mxu0 0.0
  %72 = vmatprep.subr.mxu0 0.0
  %73 = vmatpush1.msra.mxu0 0.0
  %74 = vmatprep.subr.mxu0 0.0
  %75 = vmatpush1.msra.mxu0 0.0
  %76 = vmatprep.subr.mxu0 0.0
  %77 = vmatpush1.msra.mxu0 0.0
  %78 = vmatprep.subr.mxu0 0.0
  %79 = vmatpush1.msra.mxu0 0.0
  %80 = vmatprep.subr.mxu0 0.0
  %81 = vmatpush1.msra.mxu0 0.0
  %82 = vmatprep.subr.mxu0 0.0
  %83 = vmatpush1.msra.mxu0 0.0
  %84 = vmatprep.subr.mxu0 0.0
  %85 = vmatpush1.msra.mxu0 0.0
  %86 = vmatprep.subr.mxu0 0.0
  %87 = vmatpush1.msra.mxu0 0.0
  %88 = vmatprep.subr.mxu0 0.0
  %89 = vmatpush1.msra.mxu0 0.0
  %90 = vmatprep.subr.mxu0 0.0
  %91 = vmatpush1.msra.mxu0 0.0
  %92 = vmatprep.subr.mxu0 0.0
  %93 = vmatpush1.msra.mxu0 0.0
  %94 = vmatprep.subr.mxu0 0.0
  %95 = vmatpush1.msra.mxu0 0.0
  %96 = vmatprep.subr.mxu0 0.0
  %97 = vmatpush1.msra.mxu0 0.0
  %98 = vmatprep.subr.mxu0 0.0
  %99 = vmatpush1.msra.mxu0 0.0
  %100 = vmatprep.subr.mxu0 0.0
  %101 = vmatpush1.msra.mxu0 0.0
  %102 = vmatprep.subr.mxu0 0.0
  %103 = vmatpush1.msra.mxu0 0.0
  %104 = vmatprep.subr.mxu0 0.0
  %105 = vmatpush1.msra.mxu0 0.0
  %106 = vmatprep.subr.mxu0 0.0
  %107 = vmatpush1.msra.mxu0 0.0
  %108 = vmatprep.subr.mxu0 0.0
  %109 = vmatpush1.msra.mxu0 0.0
  %110 = vmatprep.mubr.f32.mxu0 0.0
  %111 = vmatmul.mubr.f32.gmra.mrb[0].mxu0 %v41
  %v112 = vpop.f32.mrb[0].mxu0
  %v113 = vadd.f32 %v37, %v112
  %v114 = vpop.f32.mrb[0].mxu0
  %115 = vmatprep.mubr.f32.mxu0 0.0
  %116 = vmatmul.mubr.f32.gmra.mrb[0].mxu0 %v44
  %v117 = vpop.f32.mrb[0].mxu0
  %v118 = vadd.f32 %v37, %v117
  %v119 = vpop.f32.mrb[0].mxu0
  %120 = vdwg.mxu0
  %v121 = vmax.f32 %v113, 0.0
  %v122 = vmax.f32 %v118, 0.0
  %v123 = vld [vmem:[%s3] sm:$0xff]
  %v124 = vld [vmem:[%s3 + $0x8] sm:$0xff]
  %v125 = vld [vmem:[%s3 + $0x10] sm:$0xff]
  %v126 = vld [vmem:[%s3 + $0x18] sm:$0xff]
  %v127 = vld [vmem:[%s3 + $0x20] sm:$0xff]
  %v128 = vld [vmem:[%s3 + $0x28] sm:$0xff]
  %v129 = vld [vmem:[%s3 + $0x30] sm:$0xff]
  %v130 = vld [vmem:[%s3 + $0x38] sm:$0xff]
  %v131 = vld [vmem:[%s3 + $0x40] sm:$0xff]
  %v132 = vld [vmem:[%s3 + $0x48] sm:$0xff]
  %v133 = vld [vmem:[%s3 + $0x50] sm:$0xff]
  %v134 = vld [vmem:[%s3 + $0x58] sm:$0xff]
  %v135 = vld [vmem:[%s3 + $0x60] sm:$0xff]
  %v136 = vld [vmem:[%s3 + $0x68] sm:$0xff]
  %v137 = vld [vmem:[%s3 + $0x70] sm:$0xff]
  %v138 = vld [vmem:[%s3 + $0x78] sm:$0xff]
  %v139 = vld [vmem:[%s4] sm:$0x1]
  %v141 = vlaneseq
  %v142 = vshrl.u32 %v141, 7
  %v143 = vsub.s32 0, %v142
  %v144 = vrot.slane %v139, %v143
  %146 = vmatprep.subr.mxu0 0.0
  %147 = vmatpush1.msra.mxu0 %v123
  %148 = vmatprep.subr.mxu0 0.0
  %149 = vmatpush1.msra.mxu0 %v124
  %150 = vmatprep.subr.mxu0 0.0
  %151 = vmatpush1.msra.mxu0 %v125
  %152 = vmatprep.subr.mxu0 0.0
  %153 = vmatpush1.msra.mxu0 %v126
  %154 = vmatprep.subr.mxu0 0.0
  %155 = vmatpush1.msra.mxu0 %v127
  %156 = vmatprep.subr.mxu0 0.0
  %157 = vmatpush1.msra.mxu0 %v128
  %158 = vmatprep.subr.mxu0 0.0
  %159 = vmatpush1.msra.mxu0 %v129
  %160 = vmatprep.subr.mxu0 0.0
  %161 = vmatpush1.msra.mxu0 %v130
  %162 = vmatprep.subr.mxu0 0.0
  %163 = vmatpush1.msra.mxu0 %v131
  %164 = vmatprep.subr.mxu0 0.0
  %165 = vmatpush1.msra.mxu0 %v132
  %166 = vmatprep.subr.mxu0 0.0
  %167 = vmatpush1.msra.mxu0 %v133
  %168 = vmatprep.subr.mxu0 0.0
  %169 = vmatpush1.msra.mxu0 %v134
  %170 = vmatprep.subr.mxu0 0.0
  %171 = vmatpush1.msra.mxu0 %v135
  %172 = vmatprep.subr.mxu0 0.0
  %173 = vmatpush1.msra.mxu0 %v136
  %174 = vmatprep.subr.mxu0 0.0
  %175 = vmatpush1.msra.mxu0 %v137
  %176 = vmatprep.subr.mxu0 0.0
  %177 = vmatpush1.msra.mxu0 %v138
  %178 = vmatprep.subr.mxu0 0.0
  %179 = vmatpush1.msra.mxu0 0.0
  %180 = vmatprep.subr.mxu0 0.0
  %181 = vmatpush1.msra.mxu0 0.0
  %182 = vmatprep.subr.mxu0 0.0
  %183 = vmatpush1.msra.mxu0 0.0
  %184 = vmatprep.subr.mxu0 0.0
  %185 = vmatpush1.msra.mxu0 0.0
  %186 = vmatprep.subr.mxu0 0.0
  %187 = vmatpush1.msra.mxu0 0.0
  %188 = vmatprep.subr.mxu0 0.0
  %189 = vmatpush1.msra.mxu0 0.0
  %190 = vmatprep.subr.mxu0 0.0
  %191 = vmatpush1.msra.mxu0 0.0
  %192 = vmatprep.subr.mxu0 0.0
  %193 = vmatpush1.msra.mxu0 0.0
  %194 = vmatprep.subr.mxu0 0.0
  %195 = vmatpush1.msra.mxu0 0.0
  %196 = vmatprep.subr.mxu0 0.0
  %197 = vmatpush1.msra.mxu0 0.0
  %198 = vmatprep.subr.mxu0 0.0
  %199 = vmatpush1.msra.mxu0 0.0
  %200 = vmatprep.subr.mxu0 0.0
  %201 = vmatpush1.msra.mxu0 0.0
  %202 = vmatprep.subr.mxu0 0.0
  %203 = vmatpush1.msra.mxu0 0.0
  %204 = vmatprep.subr.mxu0 0.0
  %205 = vmatpush1.msra.mxu0 0.0
  %206 = vmatprep.subr.mxu0 0.0
  %207 = vmatpush1.msra.mxu0 0.0
  %208 = vmatprep.subr.mxu0 0.0
  %209 = vmatpush1.msra.mxu0 0.0
  %210 = vmatprep.mubr.f32.mxu0 0.0
  %211 = vmatmul.mubr.f32.gmra.mrb[0].mxu0 %v121
  %v212 = vpop.f32.mrb[0].mxu0
  %v213 = vadd.f32 %v144, %v212
  %v214 = vpop.f32.mrb[0].mxu0
  %215 = vmatprep.mubr.f32.mxu0 0.0
  %216 = vmatmul.mubr.f32.gmra.mrb[0].mxu0 %v122
  %v217 = vpop.f32.mrb[0].mxu0
  %v218 = vadd.f32 %v144, %v217
  %v219 = vpop.f32.mrb[0].mxu0
  %220 = vdwg.mxu0
  %v221 = vmax.f32 %v213, 0.0
  %v222 = vmax.f32 %v218, 0.0
  %v223 = vld [vmem:[%s5] sm:$0xff]
  %v224 = vld [vmem:[%s5 + $0x8] sm:$0xff]
  %v225 = vld [vmem:[%s5 + $0x10] sm:$0xff]
  %v226 = vld [vmem:[%s5 + $0x18] sm:$0xff]
  %v227 = vld [vmem:[%s6] sm:$0x1]
  %v229 = vlaneseq
  %v230 = vshrl.u32 %v229, 7
  %v231 = vsub.s32 0, %v230
  %v232 = vrot.slane %v227, %v231
  %v235 = vsel %vm39, %v221, 0
  %v238 = vsel %vm39, %v222, 0
  %240 = vmatprep.subr.mxu0 0.0
  %241 = vmatpush1.msra.mxu0 %v223
  %242 = vmatprep.subr.mxu0 0.0
  %243 = vmatpush1.msra.mxu0 %v224
  %244 = vmatprep.subr.mxu0 0.0
  %245 = vmatpush1.msra.mxu0 %v225
  %246 = vmatprep.subr.mxu0 0.0
  %247 = vmatpush1.msra.mxu0 %v226
  %248 = vmatprep.subr.mxu0 0.0
  %249 = vmatpush1.msra.mxu0 0.0
  %250 = vmatprep.subr.mxu0 0.0
  %251 = vmatpush1.msra.mxu0 0.0
  %252 = vmatprep.subr.mxu0 0.0
  %253 = vmatpush1.msra.mxu0 0.0
  %254 = vmatprep.subr.mxu0 0.0
  %255 = vmatpush1.msra.mxu0 0.0
  %256 = vmatprep.subr.mxu0 0.0
  %257 = vmatpush1.msra.mxu0 0.0
  %258 = vmatprep.subr.mxu0 0.0
  %259 = vmatpush1.msra.mxu0 0.0
  %260 = vmatprep.subr.mxu0 0.0
  %261 = vmatpush1.msra.mxu0 0.0
  %262 = vmatprep.subr.mxu0 0.0
  %263 = vmatpush1.msra.mxu0 0.0
  %264 = vmatprep.subr.mxu0 0.0
  %265 = vmatpush1.msra.mxu0 0.0
  %266 = vmatprep.subr.mxu0 0.0
  %267 = vmatpush1.msra.mxu0 0.0
  %268 = vmatprep.subr.mxu0 0.0
  %269 = vmatpush1.msra.mxu0 0.0
  %270 = vmatprep.subr.mxu0 0.0
  %271 = vmatpush1.msra.mxu0 0.0
  %272 = vmatprep.subr.mxu0 0.0
  %273 = vmatpush1.msra.mxu0 0.0
  %274 = vmatprep.subr.mxu0 0.0
  %275 = vmatpush1.msra.mxu0 0.0
  %276 = vmatprep.subr.mxu0 0.0
  %277 = vmatpush1.msra.mxu0 0.0
  %278 = vmatprep.subr.mxu0 0.0
  %279 = vmatpush1.msra.mxu0 0.0
  %280 = vmatprep.subr.mxu0 0.0
  %281 = vmatpush1.msra.mxu0 0.0
  %282 = vmatprep.subr.mxu0 0.0
  %283 = vmatpush1.msra.mxu0 0.0
  %284 = vmatprep.subr.mxu0 0.0
  %285 = vmatpush1.msra.mxu0 0.0
  %286 = vmatprep.subr.mxu0 0.0
  %287 = vmatpush1.msra.mxu0 0.0
  %288 = vmatprep.subr.mxu0 0.0
  %289 = vmatpush1.msra.mxu0 0.0
  %290 = vmatprep.subr.mxu0 0.0
  %291 = vmatpush1.msra.mxu0 0.0
  %292 = vmatprep.subr.mxu0 0.0
  %293 = vmatpush1.msra.mxu0 0.0
  %294 = vmatprep.subr.mxu0 0.0
  %295 = vmatpush1.msra.mxu0 0.0
  %296 = vmatprep.subr.mxu0 0.0
  %297 = vmatpush1.msra.mxu0 0.0
  %298 = vmatprep.subr.mxu0 0.0
  %299 = vmatpush1.msra.mxu0 0.0
  %300 = vmatprep.subr.mxu0 0.0
  %301 = vmatpush1.msra.mxu0 0.0
  %302 = vmatprep.subr.mxu0 0.0
  %303 = vmatpush1.msra.mxu0 0.0
  %304 = vmatprep.mubr.f32.mxu0 0.0
  %305 = vmatmul.mubr.f32.gmra.mrb[0].mxu0 %v235
  %v306 = vpop.f32.mrb[0].mxu0
  %v307 = vadd.f32 %v232, %v306
  %v308 = vpop.f32.mrb[0].mxu0
  %309 = vmatprep.mubr.f32.mxu0 0.0
  %310 = vmatmul.mubr.f32.gmra.mrb[0].mxu0 %v238
  %v311 = vpop.f32.mrb[0].mxu0
  %v312 = vadd.f32 %v232, %v311
  %v313 = vpop.f32.mrb[0].mxu0
  %314 = vdwg.mxu0
  %315 = vst [vmem:[%s7] sm:$0xff] %v307
  %316 = vst [vmem:[%s7 + $0x8] sm:$0xff] %v312
  // Predicated region
  $region30: #{mlp_head.1} parent=0 // pred_check
    _
  $region31: #{mlp_head.1} parent=0 // pred_check_branch
    %318 = sbr.rel (0) target = $region33
  $region32: #{mlp_head.1} parent=0 // pred_region
    _
  $region33: #{mlp_head.1} parent=0 // pred_fallthru
    _
  // Predicated region
  $region34: #{mlp_head.1} parent=0 // pred_check
    _
  $region35: #{mlp_head.1} parent=0 // pred_check_branch
    %320 = sbr.rel (0) target = $region37
  $region36: #{mlp_head.1} parent=0 // pred_region
    _
  $region37: #{mlp_head.1} parent=0 // pred_fallthru
    _

</llo_original>
